<compile_context>
chip_gen: v7x
topology: tpu7x:2x2x1
jax: 0.10.0
libtpu: 0.0.40
codegen_flags: <defaults>
</compile_context>

<pallas_src>
import functools

import jax
import jax.numpy as jnp
from jax.experimental import pallas as pl
from jax.experimental.pallas import tpu as pltpu

NEG_SLOPE = 0.01   # nn.LeakyReLU() default
LN_EPS = 1e-5      # nn.LayerNorm default eps


def _leaky(x):
    return jnp.where(x > 0, x, NEG_SLOPE * x)


def gcnnet_kernel(x_ref, adj_ref, wg_ref, bg_ref,
                  wr_ref, br_ref, wp_ref, bp_ref, o_ref,
                  *, n_layer):
    # x_ref:   (1, N, H)  one batch element
    # adj_ref: (1, N, N)
    # wg_ref:  (L, H, H)  GCN weights, transposed with LN gamma folded in
    # bg_ref:  (L, 1, H)  LN beta folded through the GCN linear (beta @ W^T)
    # wr_ref:  (H, H)     readout weight, transposed
    # br_ref:  (1, H)     readout bias, pre-scaled by N
    # wp_ref:  (H, F)     predictor weight, transposed
    # bp_ref:  (1, F)
    # o_ref:   (1, 1, F)
    x = x_ref[0].astype(jnp.float32)        # (N, H)
    adj = adj_ref[0].astype(jnp.float32)    # (N, N)

    # ---- GCN encoder (layers statically unrolled) ----
    for l in range(n_layer):
        mean = jnp.mean(x, axis=-1, keepdims=True)
        c = x - mean
        var = jnp.mean(c * c, axis=-1, keepdims=True)
        hn = c * jax.lax.rsqrt(var + LN_EPS)                               # (N, H) normalized
        # LN affine + linear-no-bias collapsed into one matmul + one bias add.
        h = jnp.dot(hn, wg_ref[l], preferred_element_type=jnp.float32) + bg_ref[l]
        h = jnp.dot(adj, h, preferred_element_type=jnp.float32)           # adj @ h
        x = x + _leaky(h)                                                 # skip connection

    # ---- ReadOut: reduce over nodes FIRST, then the linear (exact rewrite) ----
    s = jnp.sum(x, axis=0, keepdims=True)                                 # (1, H)
    r = jnp.dot(s, wr_ref[...], preferred_element_type=jnp.float32)
    r = _leaky(r + br_ref[...])                                           # bias already *N

    # ---- Predictor ----
    z = jnp.dot(r, wp_ref[...], preferred_element_type=jnp.float32) + bp_ref[...]
    z = _leaky(z)                                                         # (1, F)

    # ---- LogSoftmax over last dim ----
    m = jnp.max(z, axis=-1, keepdims=True)
    lse = m + jnp.log(jnp.sum(jnp.exp(z - m), axis=-1, keepdims=True))
    o_ref[0] = (z - lse).astype(o_ref.dtype)


def gcnnet_forward(x, adj, params):
    """x: (B, N, H), adj: (B, N, N) -> (B, F) log-probabilities."""
    B, N, H = x.shape
    wg = params["gcn_w"]        # (L, H, H)  torch layout (out, in) per layer
    gam = params["gcn_gamma"]   # (L, H)
    bet = params["gcn_beta"]    # (L, H)
    wr = params["readout_w"]    # (H, H)  torch layout (out, in)
    br = params["readout_b"]    # (H,)
    wp = params["pred_w"]       # (F, H)  torch layout (out, in)
    bp = params["pred_b"]       # (F,)
    L = wg.shape[0]
    F = wp.shape[0]

    # --- Wrapper-side folding (all exact algebraic rewrites, done once) ---
    wg_t = jnp.transpose(wg, (0, 2, 1))                  # (L, H_in, H_out)
    wg_fold = gam[:, :, None] * wg_t                     # fold LN gamma into weight
    bg_fold = jnp.einsum("lh,lho->lo", bet, wg_t)        # fold LN beta: beta @ W^T
    bg_fold = bg_fold.reshape(L, 1, H)
    wr_t = wr.T                                          # (H, H)
    br_scaled = (float(N) * br).reshape(1, H)            # readout bias summed N times
    wp_t = wp.T                                          # (H, F)
    bp2 = bp.reshape(1, F)

    kernel = functools.partial(gcnnet_kernel, n_layer=L)

    out = pl.pallas_call(
        kernel,
        out_shape=jax.ShapeDtypeStruct((B, 1, F), x.dtype),
        grid_spec=pltpu.PrefetchScalarGridSpec(
            num_scalar_prefetch=0,
            grid=(B,),
            in_specs=[
                pl.BlockSpec((1, N, H), lambda b: (b, 0, 0)),   # x, per-batch block
                pl.BlockSpec((1, N, N), lambda b: (b, 0, 0)),   # adj, per-batch block
                pl.BlockSpec((L, H, H), lambda b: (0, 0, 0)),   # folded GCN weights
                pl.BlockSpec((L, 1, H), lambda b: (0, 0, 0)),   # folded GCN bias
                pl.BlockSpec((H, H), lambda b: (0, 0)),         # readout weight^T
                pl.BlockSpec((1, H), lambda b: (0, 0)),         # readout bias * N
                pl.BlockSpec((H, F), lambda b: (0, 0)),         # predictor weight^T
                pl.BlockSpec((1, F), lambda b: (0, 0)),         # predictor bias
            ],
            out_specs=pl.BlockSpec((1, 1, F), lambda b: (b, 0, 0)),
        ),
        compiler_params=pltpu.CompilerParams(
            dimension_semantics=("parallel",),   # batch axis -> both TCs on v7x
        ),
    )(x, adj, wg_fold, bg_fold, wr_t, br_scaled, wp_t, bp2)
    return out.reshape(B, F)


def reference(x, adj, params):
    """Pure-JAX reference with the exact PyTorch op order."""
    h = x
    L = params["gcn_w"].shape[0]
    for l in range(L):
        W = params["gcn_w"][l]
        g = params["gcn_gamma"][l]
        bta = params["gcn_beta"][l]
        mean = jnp.mean(h, axis=-1, keepdims=True)
        var = jnp.mean((h - mean) ** 2, axis=-1, keepdims=True)
        ln = (h - mean) / jnp.sqrt(var + LN_EPS) * g + bta
        lin = jnp.einsum("bnh,oh->bno", ln, W)
        a = jnp.einsum("bnm,bmo->bno", adj, lin)
        h = h + jnp.where(a > 0, a, NEG_SLOPE * a)
    r = jnp.einsum("bnh,oh->bno", h, params["readout_w"]) + params["readout_b"]
    r = jnp.sum(r, axis=1)
    r = jnp.where(r > 0, r, NEG_SLOPE * r)
    z = r @ params["pred_w"].T + params["pred_b"]
    z = jnp.where(z > 0, z, NEG_SLOPE * z)
    return z - jax.scipy.special.logsumexp(z, axis=-1, keepdims=True)


if __name__ == "__main__":
    key = jax.random.PRNGKey(0)
    B, N, H, F, L = 2, 8, 32, 8, 2   # batch, nodes, hidden_size, final_output, n_layer

    keys = jax.random.split(key, 10)
    x = jax.random.normal(keys[0], (B, N, H), dtype=jnp.float32)
    adj = jax.random.uniform(keys[1], (B, N, N), dtype=jnp.float32)

    # GCN layer linears
    wg = jax.random.normal(keys[2], (L, H, H), dtype=jnp.float32) * (1.0 / (H ** 0.5))
    gam = 1.0 + 0.1 * jax.random.normal(keys[3], (L, H), dtype=jnp.float32)
    bet = 0.1 * jax.random.normal(keys[4], (L, H), dtype=jnp.float32)

    # ReadOut: xavier_uniform_ weight, default bias init
    xav_r = (6.0 / (H + H)) ** 0.5
    wr = jax.random.uniform(keys[5], (H, H), jnp.float32, -xav_r, xav_r)
    br = jax.random.uniform(keys[6], (H,), jnp.float32, -1.0 / (H ** 0.5), 1.0 / (H ** 0.5))

    # Predictor: xavier_uniform_ weight, default bias init
    xav_p = (6.0 / (H + F)) ** 0.5
    wp = jax.random.uniform(keys[7], (F, H), jnp.float32, -xav_p, xav_p)
    bp = jax.random.uniform(keys[8], (F,), jnp.float32, -1.0 / (H ** 0.5), 1.0 / (H ** 0.5))

    params = dict(gcn_w=wg, gcn_gamma=gam, gcn_beta=bet,
                  readout_w=wr, readout_b=br, pred_w=wp, pred_b=bp)

    out = gcnnet_forward(x, adj, params)
    jax.block_until_ready(out)

    ref = reference(x, adj, params)
    assert out.shape == (B, F), f"bad shape {out.shape}"
    assert jnp.allclose(out, ref, atol=1e-4, rtol=1e-4), "mismatch vs reference"

    print("KERNEL_OK")
</pallas_src>

<mosaic_0001>
module attributes {stable_mosaic.version = 11 : i64} {
  func.func @gcnnet_kernel(%arg0: i32, %arg1: memref<1x8x32xf32, #tpu.memory_space<vmem>>, %arg2: memref<1x8x8xf32, #tpu.memory_space<vmem>>, %arg3: memref<2x32x32xf32, #tpu.memory_space<vmem>>, %arg4: memref<2x1x32xf32, #tpu.memory_space<vmem>>, %arg5: memref<32x32xf32, #tpu.memory_space<vmem>>, %arg6: memref<1x32xf32, #tpu.memory_space<vmem>>, %arg7: memref<32x8xf32, #tpu.memory_space<vmem>>, %arg8: memref<1x8xf32, #tpu.memory_space<vmem>>, %arg9: memref<1x1x8xf32, #tpu.memory_space<vmem>>) attributes {dimension_semantics = [#tpu.dimension_semantics<parallel>], iteration_bounds = array<i64: 2>, scalar_prefetch = 0 : i64, scratch_operands = 0 : i64, tpu.core_type = #tpu.core_type<tc>, window_params = [{transform_indices = @transform_0, window_bounds = array<i64: 1, 8, 32>}, {transform_indices = @transform_1, window_bounds = array<i64: 1, 8, 8>}, {pipeline_mode = #tpu.pipeline_mode<synchronous>, transform_indices = @transform_2, window_bounds = array<i64: 2, 32, 32>}, {pipeline_mode = #tpu.pipeline_mode<synchronous>, transform_indices = @transform_3, window_bounds = array<i64: 2, 1, 32>}, {pipeline_mode = #tpu.pipeline_mode<synchronous>, transform_indices = @transform_4, window_bounds = array<i64: 32, 32>}, {pipeline_mode = #tpu.pipeline_mode<synchronous>, transform_indices = @transform_5, window_bounds = array<i64: 1, 32>}, {pipeline_mode = #tpu.pipeline_mode<synchronous>, transform_indices = @transform_6, window_bounds = array<i64: 32, 8>}, {pipeline_mode = #tpu.pipeline_mode<synchronous>, transform_indices = @transform_7, window_bounds = array<i64: 1, 8>}, {transform_indices = @transform_8, window_bounds = array<i64: 1, 1, 8>}]} {
    %c0 = arith.constant 0 : index
    %c0_0 = arith.constant 0 : index
    %c0_1 = arith.constant 0 : index
    %0 = vector.load %arg1[%c0, %c0_0, %c0_1] : memref<1x8x32xf32, #tpu.memory_space<vmem>>, vector<1x8x32xf32>
    %1 = vector.shape_cast %0 : vector<1x8x32xf32> to vector<8x32xf32>
    %c0_2 = arith.constant 0 : index
    %c0_3 = arith.constant 0 : index
    %c0_4 = arith.constant 0 : index
    %2 = vector.load %arg2[%c0_2, %c0_3, %c0_4] : memref<1x8x8xf32, #tpu.memory_space<vmem>>, vector<1x8x8xf32>
    %3 = vector.shape_cast %2 : vector<1x8x8xf32> to vector<8x8xf32>
    %cst = arith.constant dense<0.000000e+00> : vector<8xf32>
    %4 = vector.multi_reduction <add>, %1, %cst [1] : vector<8x32xf32> to vector<8xf32>
    %5 = vector.shape_cast %4 : vector<8xf32> to vector<8x1xf32>
    %cst_5 = arith.constant 3.200000e+01 : f32
    %6 = vector.broadcast %cst_5 : f32 to vector<8x1xf32>
    %7 = arith.divf %5, %6 : vector<8x1xf32>
    %8 = vector.broadcast %7 : vector<8x1xf32> to vector<8x32xf32>
    %9 = arith.subf %1, %8 : vector<8x32xf32>
    %10 = arith.mulf %9, %9 : vector<8x32xf32>
    %cst_6 = arith.constant dense<0.000000e+00> : vector<8xf32>
    %11 = vector.multi_reduction <add>, %10, %cst_6 [1] : vector<8x32xf32> to vector<8xf32>
    %12 = vector.shape_cast %11 : vector<8xf32> to vector<8x1xf32>
    %cst_7 = arith.constant 3.200000e+01 : f32
    %13 = vector.broadcast %cst_7 : f32 to vector<8x1xf32>
    %14 = arith.divf %12, %13 : vector<8x1xf32>
    %cst_8 = arith.constant 9.99999974E-6 : f32
    %15 = vector.broadcast %cst_8 : f32 to vector<8x1xf32>
    %16 = arith.addf %14, %15 : vector<8x1xf32>
    %17 = math.rsqrt %16 : vector<8x1xf32>
    %18 = vector.broadcast %17 : vector<8x1xf32> to vector<8x32xf32>
    %19 = arith.mulf %9, %18 : vector<8x32xf32>
    %c0_9 = arith.constant 0 : index
    %c0_10 = arith.constant 0 : index
    %c0_11 = arith.constant 0 : index
    %20 = vector.load %arg3[%c0_9, %c0_10, %c0_11] : memref<2x32x32xf32, #tpu.memory_space<vmem>>, vector<1x32x32xf32>
    %21 = vector.shape_cast %20 : vector<1x32x32xf32> to vector<32x32xf32>
    %cst_12 = arith.constant dense<0.000000e+00> : vector<8x32xf32>
    %22 = tpu.matmul %19, %21, %cst_12 {dimension_numbers = #tpu.dot_dimension_numbers<[1], [0], [0], [1], [0, 0, 1, 1], [], []>} : vector<8x32xf32>, vector<32x32xf32>, vector<8x32xf32> -> vector<8x32xf32>
    %c0_13 = arith.constant 0 : index
    %c0_14 = arith.constant 0 : index
    %c0_15 = arith.constant 0 : index
    %23 = vector.load %arg4[%c0_13, %c0_14, %c0_15] : memref<2x1x32xf32, #tpu.memory_space<vmem>>, vector<1x1x32xf32>
    %24 = vector.shape_cast %23 : vector<1x1x32xf32> to vector<1x32xf32>
    %25 = vector.broadcast %24 : vector<1x32xf32> to vector<8x32xf32>
    %26 = arith.addf %22, %25 : vector<8x32xf32>
    %cst_16 = arith.constant dense<0.000000e+00> : vector<8x32xf32>
    %27 = tpu.matmul %3, %26, %cst_16 {dimension_numbers = #tpu.dot_dimension_numbers<[1], [0], [0], [1], [0, 0, 1, 1], [], []>} : vector<8x8xf32>, vector<8x32xf32>, vector<8x32xf32> -> vector<8x32xf32>
    %cst_17 = arith.constant 0.000000e+00 : f32
    %28 = vector.broadcast %cst_17 : f32 to vector<8x32xf32>
    %29 = arith.cmpf ogt, %27, %28 : vector<8x32xf32>
    %cst_18 = arith.constant 0.00999999977 : f32
    %30 = vector.broadcast %cst_18 : f32 to vector<8x32xf32>
    %31 = arith.mulf %30, %27 : vector<8x32xf32>
    %32 = arith.select %29, %27, %31 : vector<8x32xi1>, vector<8x32xf32>
    %33 = arith.addf %1, %32 : vector<8x32xf32>
    %cst_19 = arith.constant dense<0.000000e+00> : vector<8xf32>
    %34 = vector.multi_reduction <add>, %33, %cst_19 [1] : vector<8x32xf32> to vector<8xf32>
    %35 = vector.shape_cast %34 : vector<8xf32> to vector<8x1xf32>
    %cst_20 = arith.constant 3.200000e+01 : f32
    %36 = vector.broadcast %cst_20 : f32 to vector<8x1xf32>
    %37 = arith.divf %35, %36 : vector<8x1xf32>
    %38 = vector.broadcast %37 : vector<8x1xf32> to vector<8x32xf32>
    %39 = arith.subf %33, %38 : vector<8x32xf32>
    %40 = arith.mulf %39, %39 : vector<8x32xf32>
    %cst_21 = arith.constant dense<0.000000e+00> : vector<8xf32>
    %41 = vector.multi_reduction <add>, %40, %cst_21 [1] : vector<8x32xf32> to vector<8xf32>
    %42 = vector.shape_cast %41 : vector<8xf32> to vector<8x1xf32>
    %cst_22 = arith.constant 3.200000e+01 : f32
    %43 = vector.broadcast %cst_22 : f32 to vector<8x1xf32>
    %44 = arith.divf %42, %43 : vector<8x1xf32>
    %cst_23 = arith.constant 9.99999974E-6 : f32
    %45 = vector.broadcast %cst_23 : f32 to vector<8x1xf32>
    %46 = arith.addf %44, %45 : vector<8x1xf32>
    %47 = math.rsqrt %46 : vector<8x1xf32>
    %48 = vector.broadcast %47 : vector<8x1xf32> to vector<8x32xf32>
    %49 = arith.mulf %39, %48 : vector<8x32xf32>
    %c1 = arith.constant 1 : index
    %c0_24 = arith.constant 0 : index
    %c0_25 = arith.constant 0 : index
    %50 = vector.load %arg3[%c1, %c0_24, %c0_25] : memref<2x32x32xf32, #tpu.memory_space<vmem>>, vector<1x32x32xf32>
    %51 = vector.shape_cast %50 : vector<1x32x32xf32> to vector<32x32xf32>
    %cst_26 = arith.constant dense<0.000000e+00> : vector<8x32xf32>
    %52 = tpu.matmul %49, %51, %cst_26 {dimension_numbers = #tpu.dot_dimension_numbers<[1], [0], [0], [1], [0, 0, 1, 1], [], []>} : vector<8x32xf32>, vector<32x32xf32>, vector<8x32xf32> -> vector<8x32xf32>
    %c1_27 = arith.constant 1 : index
    %c0_28 = arith.constant 0 : index
    %c0_29 = arith.constant 0 : index
    %53 = vector.load %arg4[%c1_27, %c0_28, %c0_29] : memref<2x1x32xf32, #tpu.memory_space<vmem>>, vector<1x1x32xf32>
    %54 = vector.shape_cast %53 : vector<1x1x32xf32> to vector<1x32xf32>
    %55 = vector.broadcast %54 : vector<1x32xf32> to vector<8x32xf32>
    %56 = arith.addf %52, %55 : vector<8x32xf32>
    %cst_30 = arith.constant dense<0.000000e+00> : vector<8x32xf32>
    %57 = tpu.matmul %3, %56, %cst_30 {dimension_numbers = #tpu.dot_dimension_numbers<[1], [0], [0], [1], [0, 0, 1, 1], [], []>} : vector<8x8xf32>, vector<8x32xf32>, vector<8x32xf32> -> vector<8x32xf32>
    %cst_31 = arith.constant 0.000000e+00 : f32
    %58 = vector.broadcast %cst_31 : f32 to vector<8x32xf32>
    %59 = arith.cmpf ogt, %57, %58 : vector<8x32xf32>
    %cst_32 = arith.constant 0.00999999977 : f32
    %60 = vector.broadcast %cst_32 : f32 to vector<8x32xf32>
    %61 = arith.mulf %60, %57 : vector<8x32xf32>
    %62 = arith.select %59, %57, %61 : vector<8x32xi1>, vector<8x32xf32>
    %63 = arith.addf %33, %62 : vector<8x32xf32>
    %cst_33 = arith.constant dense<0.000000e+00> : vector<32xf32>
    %64 = vector.multi_reduction <add>, %63, %cst_33 [0] : vector<8x32xf32> to vector<32xf32>
    %65 = vector.shape_cast %64 : vector<32xf32> to vector<1x32xf32>
    %c0_34 = arith.constant 0 : index
    %c0_35 = arith.constant 0 : index
    %66 = vector.load %arg5[%c0_34, %c0_35] : memref<32x32xf32, #tpu.memory_space<vmem>>, vector<32x32xf32>
    %cst_36 = arith.constant dense<0.000000e+00> : vector<1x32xf32>
    %67 = tpu.matmul %65, %66, %cst_36 {dimension_numbers = #tpu.dot_dimension_numbers<[1], [0], [0], [1], [0, 0, 1, 1], [], []>} : vector<1x32xf32>, vector<32x32xf32>, vector<1x32xf32> -> vector<1x32xf32>
    %c0_37 = arith.constant 0 : index
    %c0_38 = arith.constant 0 : index
    %68 = vector.load %arg6[%c0_37, %c0_38] : memref<1x32xf32, #tpu.memory_space<vmem>>, vector<1x32xf32>
    %69 = arith.addf %67, %68 : vector<1x32xf32>
    %cst_39 = arith.constant 0.000000e+00 : f32
    %70 = vector.broadcast %cst_39 : f32 to vector<1x32xf32>
    %71 = arith.cmpf ogt, %69, %70 : vector<1x32xf32>
    %cst_40 = arith.constant 0.00999999977 : f32
    %72 = vector.broadcast %cst_40 : f32 to vector<1x32xf32>
    %73 = arith.mulf %72, %69 : vector<1x32xf32>
    %74 = arith.select %71, %69, %73 : vector<1x32xi1>, vector<1x32xf32>
    %c0_41 = arith.constant 0 : index
    %c0_42 = arith.constant 0 : index
    %75 = vector.load %arg7[%c0_41, %c0_42] : memref<32x8xf32, #tpu.memory_space<vmem>>, vector<32x8xf32>
    %cst_43 = arith.constant dense<0.000000e+00> : vector<1x8xf32>
    %76 = tpu.matmul %74, %75, %cst_43 {dimension_numbers = #tpu.dot_dimension_numbers<[1], [0], [0], [1], [0, 0, 1, 1], [], []>} : vector<1x32xf32>, vector<32x8xf32>, vector<1x8xf32> -> vector<1x8xf32>
    %c0_44 = arith.constant 0 : index
    %c0_45 = arith.constant 0 : index
    %77 = vector.load %arg8[%c0_44, %c0_45] : memref<1x8xf32, #tpu.memory_space<vmem>>, vector<1x8xf32>
    %78 = arith.addf %76, %77 : vector<1x8xf32>
    %cst_46 = arith.constant 0.000000e+00 : f32
    %79 = vector.broadcast %cst_46 : f32 to vector<1x8xf32>
    %80 = arith.cmpf ogt, %78, %79 : vector<1x8xf32>
    %cst_47 = arith.constant 0.00999999977 : f32
    %81 = vector.broadcast %cst_47 : f32 to vector<1x8xf32>
    %82 = arith.mulf %81, %78 : vector<1x8xf32>
    %83 = arith.select %80, %78, %82 : vector<1x8xi1>, vector<1x8xf32>
    %cst_48 = arith.constant dense<0xFF800000> : vector<1xf32>
    %84 = vector.multi_reduction <maximumf>, %83, %cst_48 [1] : vector<1x8xf32> to vector<1xf32>
    %85 = vector.shape_cast %84 : vector<1xf32> to vector<1x1xf32>
    %86 = vector.broadcast %85 : vector<1x1xf32> to vector<1x8xf32>
    %87 = arith.subf %83, %86 : vector<1x8xf32>
    %88 = math.exp %87 : vector<1x8xf32>
    %cst_49 = arith.constant dense<0.000000e+00> : vector<1xf32>
    %89 = vector.multi_reduction <add>, %88, %cst_49 [1] : vector<1x8xf32> to vector<1xf32>
    %90 = vector.shape_cast %89 : vector<1xf32> to vector<1x1xf32>
    %91 = math.log %90 : vector<1x1xf32>
    %92 = arith.addf %85, %91 : vector<1x1xf32>
    %93 = vector.broadcast %92 : vector<1x1xf32> to vector<1x8xf32>
    %94 = arith.subf %83, %93 : vector<1x8xf32>
    %c0_50 = arith.constant 0 : index
    %c0_51 = arith.constant 0 : index
    %c0_52 = arith.constant 0 : index
    %95 = vector.load %arg9[%c0_50, %c0_51, %c0_52] : memref<1x1x8xf32, #tpu.memory_space<vmem>>, vector<1x1x8xf32>
    %96 = vector.shape_cast %95 : vector<1x1x8xf32> to vector<1x8xf32>
    %97 = vector.shape_cast %94 : vector<1x8xf32> to vector<1x1x8xf32>
    tpu.vector_store %arg9[%c0_50, %c0_51, %c0_52], %97 {strides = array<i32>} : memref<1x1x8xf32, #tpu.memory_space<vmem>>, vector<1x1x8xf32>,
    return
  }
  func.func @transform_0(%arg0: i32) -> (i32, i32, i32) {
    %c0_i32 = arith.constant 0 : i32
    %c0_i32_0 = arith.constant 0 : i32
    %c0_i32_1 = arith.constant 0 : i32
    return %arg0, %c0_i32, %c0_i32_0 : i32, i32, i32
  }
  func.func @transform_1(%arg0: i32) -> (i32, i32, i32) {
    %c0_i32 = arith.constant 0 : i32
    %c0_i32_0 = arith.constant 0 : i32
    %c0_i32_1 = arith.constant 0 : i32
    return %arg0, %c0_i32, %c0_i32_0 : i32, i32, i32
  }
  func.func @transform_2(%arg0: i32) -> (i32, i32, i32) {
    %c0_i32 = arith.constant 0 : i32
    %c0_i32_0 = arith.constant 0 : i32
    %c0_i32_1 = arith.constant 0 : i32
    %c0_i32_2 = arith.constant 0 : i32
    return %c0_i32, %c0_i32_0, %c0_i32_1 : i32, i32, i32
  }
  func.func @transform_3(%arg0: i32) -> (i32, i32, i32) {
    %c0_i32 = arith.constant 0 : i32
    %c0_i32_0 = arith.constant 0 : i32
    %c0_i32_1 = arith.constant 0 : i32
    %c0_i32_2 = arith.constant 0 : i32
    return %c0_i32, %c0_i32_0, %c0_i32_1 : i32, i32, i32
  }
  func.func @transform_4(%arg0: i32) -> (i32, i32) {
    %c0_i32 = arith.constant 0 : i32
    %c0_i32_0 = arith.constant 0 : i32
    %c0_i32_1 = arith.constant 0 : i32
    return %c0_i32, %c0_i32_0 : i32, i32
  }
  func.func @transform_5(%arg0: i32) -> (i32, i32) {
    %c0_i32 = arith.constant 0 : i32
    %c0_i32_0 = arith.constant 0 : i32
    %c0_i32_1 = arith.constant 0 : i32
    return %c0_i32, %c0_i32_0 : i32, i32
  }
  func.func @transform_6(%arg0: i32) -> (i32, i32) {
    %c0_i32 = arith.constant 0 : i32
    %c0_i32_0 = arith.constant 0 : i32
    %c0_i32_1 = arith.constant 0 : i32
    return %c0_i32, %c0_i32_0 : i32, i32
  }
  func.func @transform_7(%arg0: i32) -> (i32, i32) {
    %c0_i32 = arith.constant 0 : i32
    %c0_i32_0 = arith.constant 0 : i32
    %c0_i32_1 = arith.constant 0 : i32
    return %c0_i32, %c0_i32_0 : i32, i32
  }
  func.func @transform_8(%arg0: i32) -> (i32, i32, i32) {
    %c0_i32 = arith.constant 0 : i32
    %c0_i32_0 = arith.constant 0 : i32
    %c0_i32_1 = arith.constant 0 : i32
    return %arg0, %c0_i32, %c0_i32_0 : i32, i32, i32
  }
}

</mosaic_0001>

<llo_original>
// kernel: tpu_custom_call.1
$region0: #{tpu_custom_call.1}
  #allocation0 [shape = 'u32[]', space=smem, size = 0x4, offset = 0x4, fixed_abs, tag = 'smem constant byte address 0x4 - core index']
  #allocation1 [shape = 'u32[144,128]{1,0:T(1,128)}', space=vmem, size = 0x12000, scoped, tag = 'internal scratch']
  %s0 = inlined_call_operand.vmem [shape: f32[2,8,32], index: 0, kind: input, shape index: {}]
  %s1 = inlined_call_operand.hbm [shape: f32[2,8,8], index: 1, kind: input, shape index: {}]
  %s2 = inlined_call_operand.hbm [shape: f32[2,32,32], index: 2, kind: input, shape index: {}]
  %s3 = inlined_call_operand.vmem [shape: f32[2,1,32], index: 3, kind: input, shape index: {}]
  %s4 = inlined_call_operand.vmem [shape: f32[32,32], index: 4, kind: input, shape index: {}]
  %s5 = inlined_call_operand.hbm [shape: f32[1,32], index: 5, kind: input, shape index: {}]
  %s6 = inlined_call_operand.vmem [shape: f32[32,8], index: 6, kind: input, shape index: {}]
  %s7 = inlined_call_operand.vmem [shape: f32[1,8], index: 7, kind: input, shape index: {}]
  %s8 = inlined_call_operand.hbm [shape: f32[2,1,8], index: 8, kind: output, shape index: {}]
  %s9 = sld [smem:[#allocation0]]
  $region77: #{tpu_custom_call.1} parent=0
    _
  %s11 = ssub.s32 1, %s9
  %s12 = scalar_select 0, %s11, %s9
  $region1: #{tpu_custom_call.1} parent=0
    #allocation2 [shape = 'u8[8192]{0}', space=vmem, size = 0x2000, scoped, tag = 'input window, operand 1']
    #allocation3 [shape = 's32[2]{0}', space=sflag, size = 0x8, scoped, tag = 'scoped memory for tpu_custom_call.1']
    #allocation4 [shape = 's32[2]{0}', space=sflag, size = 0x8, scoped, tag = 'scoped memory for tpu_custom_call.1']
    #allocation5 [shape = 'u8[32768]{0}', space=vmem, size = 0x8000, scoped, tag = 'input window, operand 2, single buffered']
    #allocation6 [shape = 's32[1]{0}', space=sflag, size = 0x4, scoped, tag = 'scoped memory for tpu_custom_call.1']
    #allocation7 [shape = 'u8[512]{0}', space=vmem, size = 0x400, scoped, tag = 'input window, operand 5, single buffered']
    #allocation8 [shape = 'u8[1024]{0}', space=vmem, size = 0x400, scoped, tag = 'output window, operand 0']
    %13 = vsyncpa [#allocation3], 0
    %s14 = scalar_lea.sflag [#allocation3], 1
    %15 = vsyncpa %s14, 0
    %16 = vsyncpa [#allocation6], 0
    %17 = vsyncpa [#allocation4], 0
    %s18 = scalar_lea.sflag [#allocation4], 1
    %19 = vsyncpa %s18, 0
    loop: start=0, step=1, limit=4
    $region2: #{tpu_custom_call.1} parent=1 // loop_pre_header
      _
    $region3: #{tpu_custom_call.1} parent=1 // loop_header
      %s21 = sphi 0, %s25
      %p22 = scmp.ge.s32.totalorder %s21, 4
      %s31 = sphi 0, %s33
      %s34 = sphi 0, %s31
      %s35 = sphi 0, %s34
      %s51 = sphi 0, %s35
      %s57 = sphi 0, %s59
      %s60 = sphi 0, %s57
      %s61 = sphi 0, %s60
      %s77 = sphi 0, %s61
      %s81 = sphi 0, %s81
      %s83 = sphi 0, %s81
      %s84 = sphi 0, %s83
      %s98 = sphi 0, %s84
      %s102 = sphi 0, %s102
      %s104 = sphi 0, %s102
      %s105 = sphi 0, %s104
      %s119 = sphi 0, %s105
      %s123 = sphi 0, %s123
      %s125 = sphi 0, %s123
      %s126 = sphi 0, %s125
      %s140 = sphi 0, %s126
      %s144 = sphi 0, %s144
      %s146 = sphi 0, %s144
      %s147 = sphi 0, %s146
      %s161 = sphi 0, %s147
      %s165 = sphi 0, %s165
      %s167 = sphi 0, %s165
      %s168 = sphi 0, %s167
      %s182 = sphi 0, %s168
      %s186 = sphi 0, %s186
      %s188 = sphi 0, %s186
      %s189 = sphi 0, %s188
      %s203 = sphi 0, %s189
      %s209 = sphi 0, %s211
      %s212 = sphi 0, %s209
      %s213 = sphi 0, %s212
      %s229 = sphi 0, %s213
    $region4: #{tpu_custom_call.1} parent=1 // loop_header_branch
      %24 = sbr.rel (%p22) target = $region8
    $region5: #{tpu_custom_call.1} parent=1 // loop_body
      %s26 = ssub.s32 %s21, 1
      %s27 = ssub.s32 %s21, 2
      %s28 = sadd.s32 %s21, 1
      %s29 = ssub.s32 %s21, %s28
      %p30 = scmp.eq.s32.totalorder %s29, 0
      %s32 = sadd.s32 %s31, 1
      %s33 = scalar_select %p30, %s31, %s32
      %p36 = pneg %p30
      %p37 = scmp.eq.s32.totalorder %s21, 1
      %p38 = por %p36, %p37
      %p39 = scmp.ne.s32.totalorder %s31, %s34
      %p40 = scmp.eq.s32.totalorder %s21, 0
      %p41 = por %p39, %p40
      %p42 = scmp.ne.s32.totalorder %s31, %s34
      %p43 = scmp.eq.s32.totalorder %s26, 1
      %p44 = por %p42, %p43
      %p45 = scmp.ne.s32.totalorder %s34, %s35
      %p46 = scmp.eq.s32.totalorder %s26, 0
      %p47 = por %p45, %p46
      %p48 = scmp.ne.s32.totalorder %s34, %s35
      %p49 = scmp.eq.s32.totalorder %s27, 1
      %p50 = por %p48, %p49
      %p52 = scmp.ne.s32.totalorder %s35, %s51
      %p53 = scmp.eq.s32.totalorder %s27, 0
      %p54 = por %p52, %p53
      %s55 = ssub.s32 %s21, %s28
      %p56 = scmp.eq.s32.totalorder %s55, 0
      %s58 = sadd.s32 %s57, 1
      %s59 = scalar_select %p56, %s57, %s58
      %p62 = pneg %p56
      %p63 = scmp.eq.s32.totalorder %s21, 1
      %p64 = por %p62, %p63
      %p65 = scmp.ne.s32.totalorder %s57, %s60
      %p66 = scmp.eq.s32.totalorder %s21, 0
      %p67 = por %p65, %p66
      %p68 = scmp.ne.s32.totalorder %s57, %s60
      %p69 = scmp.eq.s32.totalorder %s26, 1
      %p70 = por %p68, %p69
      %p71 = scmp.ne.s32.totalorder %s60, %s61
      %p72 = scmp.eq.s32.totalorder %s26, 0
      %p73 = por %p71, %p72
      %p74 = scmp.ne.s32.totalorder %s60, %s61
      %p75 = scmp.eq.s32.totalorder %s27, 1
      %p76 = por %p74, %p75
      %p78 = scmp.ne.s32.totalorder %s61, %s77
      %p79 = scmp.eq.s32.totalorder %s27, 0
      %p80 = por %p78, %p79
      %s82 = sadd.s32 %s81, 1
      %p85 = scmp.eq.s32.totalorder %s21, 1
      %p86 = scmp.ne.s32.totalorder %s81, %s83
      %p87 = scmp.eq.s32.totalorder %s21, 0
      %p88 = por %p86, %p87
      %p89 = scmp.ne.s32.totalorder %s81, %s83
      %p90 = scmp.eq.s32.totalorder %s26, 1
      %p91 = por %p89, %p90
      %p92 = scmp.ne.s32.totalorder %s83, %s84
      %p93 = scmp.eq.s32.totalorder %s26, 0
      %p94 = por %p92, %p93
      %p95 = scmp.ne.s32.totalorder %s83, %s84
      %p96 = scmp.eq.s32.totalorder %s27, 1
      %p97 = por %p95, %p96
      %p99 = scmp.ne.s32.totalorder %s84, %s98
      %p100 = scmp.eq.s32.totalorder %s27, 0
      %p101 = por %p99, %p100
      %s103 = sadd.s32 %s102, 1
      %p106 = scmp.eq.s32.totalorder %s21, 1
      %p107 = scmp.ne.s32.totalorder %s102, %s104
      %p108 = scmp.eq.s32.totalorder %s21, 0
      %p109 = por %p107, %p108
      %p110 = scmp.ne.s32.totalorder %s102, %s104
      %p111 = scmp.eq.s32.totalorder %s26, 1
      %p112 = por %p110, %p111
      %p113 = scmp.ne.s32.totalorder %s104, %s105
      %p114 = scmp.eq.s32.totalorder %s26, 0
      %p115 = por %p113, %p114
      %p116 = scmp.ne.s32.totalorder %s104, %s105
      %p117 = scmp.eq.s32.totalorder %s27, 1
      %p118 = por %p116, %p117
      %p120 = scmp.ne.s32.totalorder %s105, %s119
      %p121 = scmp.eq.s32.totalorder %s27, 0
      %p122 = por %p120, %p121
      %s124 = sadd.s32 %s123, 1
      %p127 = scmp.eq.s32.totalorder %s21, 1
      %p128 = scmp.ne.s32.totalorder %s123, %s125
      %p129 = scmp.eq.s32.totalorder %s21, 0
      %p130 = por %p128, %p129
      %p131 = scmp.ne.s32.totalorder %s123, %s125
      %p132 = scmp.eq.s32.totalorder %s26, 1
      %p133 = por %p131, %p132
      %p134 = scmp.ne.s32.totalorder %s125, %s126
      %p135 = scmp.eq.s32.totalorder %s26, 0
      %p136 = por %p134, %p135
      %p137 = scmp.ne.s32.totalorder %s125, %s126
      %p138 = scmp.eq.s32.totalorder %s27, 1
      %p139 = por %p137, %p138
      %p141 = scmp.ne.s32.totalorder %s126, %s140
      %p142 = scmp.eq.s32.totalorder %s27, 0
      %p143 = por %p141, %p142
      %s145 = sadd.s32 %s144, 1
      %p148 = scmp.eq.s32.totalorder %s21, 1
      %p149 = scmp.ne.s32.totalorder %s144, %s146
      %p150 = scmp.eq.s32.totalorder %s21, 0
      %p151 = por %p149, %p150
      %p152 = scmp.ne.s32.totalorder %s144, %s146
      %p153 = scmp.eq.s32.totalorder %s26, 1
      %p154 = por %p152, %p153
      %p155 = scmp.ne.s32.totalorder %s146, %s147
      %p156 = scmp.eq.s32.totalorder %s26, 0
      %p157 = por %p155, %p156
      %p158 = scmp.ne.s32.totalorder %s146, %s147
      %p159 = scmp.eq.s32.totalorder %s27, 1
      %p160 = por %p158, %p159
      %p162 = scmp.ne.s32.totalorder %s147, %s161
      %p163 = scmp.eq.s32.totalorder %s27, 0
      %p164 = por %p162, %p163
      %s166 = sadd.s32 %s165, 1
      %p169 = scmp.eq.s32.totalorder %s21, 1
      %p170 = scmp.ne.s32.totalorder %s165, %s167
      %p171 = scmp.eq.s32.totalorder %s21, 0
      %p172 = por %p170, %p171
      %p173 = scmp.ne.s32.totalorder %s165, %s167
      %p174 = scmp.eq.s32.totalorder %s26, 1
      %p175 = por %p173, %p174
      %p176 = scmp.ne.s32.totalorder %s167, %s168
      %p177 = scmp.eq.s32.totalorder %s26, 0
      %p178 = por %p176, %p177
      %p179 = scmp.ne.s32.totalorder %s167, %s168
      %p180 = scmp.eq.s32.totalorder %s27, 1
      %p181 = por %p179, %p180
      %p183 = scmp.ne.s32.totalorder %s168, %s182
      %p184 = scmp.eq.s32.totalorder %s27, 0
      %p185 = por %p183, %p184
      %s187 = sadd.s32 %s186, 1
      %p190 = scmp.eq.s32.totalorder %s21, 1
      %p191 = scmp.ne.s32.totalorder %s186, %s188
      %p192 = scmp.eq.s32.totalorder %s21, 0
      %p193 = por %p191, %p192
      %p194 = scmp.ne.s32.totalorder %s186, %s188
      %p195 = scmp.eq.s32.totalorder %s26, 1
      %p196 = por %p194, %p195
      %p197 = scmp.ne.s32.totalorder %s188, %s189
      %p198 = scmp.eq.s32.totalorder %s26, 0
      %p199 = por %p197, %p198
      %p200 = scmp.ne.s32.totalorder %s188, %s189
      %p201 = scmp.eq.s32.totalorder %s27, 1
      %p202 = por %p200, %p201
      %p204 = scmp.ne.s32.totalorder %s189, %s203
      %p205 = scmp.eq.s32.totalorder %s27, 0
      %p206 = por %p204, %p205
      %s207 = ssub.s32 %s21, %s28
      %p208 = scmp.eq.s32.totalorder %s207, 0
      %s210 = sadd.s32 %s209, 1
      %s211 = scalar_select %p208, %s209, %s210
      %p214 = pneg %p208
      %p215 = scmp.eq.s32.totalorder %s21, 1
      %p216 = por %p214, %p215
      %p217 = scmp.ne.s32.totalorder %s209, %s212
      %p218 = scmp.eq.s32.totalorder %s21, 0
      %p219 = por %p217, %p218
      %p220 = scmp.ne.s32.totalorder %s209, %s212
      %p221 = scmp.eq.s32.totalorder %s26, 1
      %p222 = por %p220, %p221
      %p223 = scmp.ne.s32.totalorder %s212, %s213
      %p224 = scmp.eq.s32.totalorder %s26, 0
      %p225 = por %p223, %p224
      %p226 = scmp.ne.s32.totalorder %s212, %s213
      %p227 = scmp.eq.s32.totalorder %s27, 1
      %p228 = por %p226, %p227
      %p230 = scmp.ne.s32.totalorder %s213, %s229
      %p231 = scmp.eq.s32.totalorder %s27, 0
      %p232 = por %p230, %p231
      %p233 = scmp.le.s32.totalorder 1, %s21
      %p234 = scmp.lt.s32.totalorder %s21, 3
      %p235 = pnand %p233, %p234
      %p236 = pneg %p235
      // Predicated region
      $region9: #{tpu_custom_call.1} parent=5 // pred_check
        _
      $region10: #{tpu_custom_call.1} parent=5 // pred_check_branch
        %238 = sbr.rel (%p235) target = $region12
      $region11: #{tpu_custom_call.1} parent=5 // pred_region
        %s239 = ssub.s32 %s21, 1
        // Predicated region
        $region13: #{tpu_custom_call.1} parent=11 // pred_check
          %p240 = pneg %p94
        $region14: #{tpu_custom_call.1} parent=11 // pred_check_branch
          %242 = sbr.rel (%p240) target = $region16
        $region15: #{tpu_custom_call.1} parent=11 // pred_region
          %s244 = ssub.s32 1024, 1024
          %245 = vsyncadd [#allocation6], %s244
          %s246 = sshll.u32 [#allocation5], 4
          %s247 = int_to_ptr.vmem [resolvable:$true] %s246
          %252 = dma.hbm_to_vmem [thread:$0]  %s2, 1024, %s247, [#allocation6], 128, 128, 8
        $region16: #{tpu_custom_call.1} parent=11 // pred_fallthru
          _
        // Predicated region
        $region17: #{tpu_custom_call.1} parent=11 // pred_check
          %p253 = pneg %p115
        $region18: #{tpu_custom_call.1} parent=11 // pred_check_branch
          %255 = sbr.rel (%p253) target = $region20
        $region19: #{tpu_custom_call.1} parent=11 // pred_region
          _
        $region20: #{tpu_custom_call.1} parent=11 // pred_fallthru
          _
        // Predicated region
        $region21: #{tpu_custom_call.1} parent=11 // pred_check
          %p256 = pneg %p136
        $region22: #{tpu_custom_call.1} parent=11 // pred_check_branch
          %258 = sbr.rel (%p256) target = $region24
        $region23: #{tpu_custom_call.1} parent=11 // pred_region
          _
        $region24: #{tpu_custom_call.1} parent=11 // pred_fallthru
          _
        // Predicated region
        $region25: #{tpu_custom_call.1} parent=11 // pred_check
          %p259 = pneg %p157
        $region26: #{tpu_custom_call.1} parent=11 // pred_check_branch
          %261 = sbr.rel (%p259) target = $region28
        $region27: #{tpu_custom_call.1} parent=11 // pred_region
          %s263 = ssub.s32 16, 16
          %264 = vsyncadd [#allocation6], %s263
          %s266 = sshll.u32 [#allocation7], 4
          %s267 = int_to_ptr.vmem [resolvable:$true] %s266
          %269 = dma.hbm_to_vmem [thread:$0]  %s5, 16, %s267, [#allocation6]
        $region28: #{tpu_custom_call.1} parent=11 // pred_fallthru
          _
        // Predicated region
        $region29: #{tpu_custom_call.1} parent=11 // pred_check
          %p270 = pneg %p178
        $region30: #{tpu_custom_call.1} parent=11 // pred_check_branch
          %272 = sbr.rel (%p270) target = $region32
        $region31: #{tpu_custom_call.1} parent=11 // pred_region
          _
        $region32: #{tpu_custom_call.1} parent=11 // pred_fallthru
          _
        // Predicated region
        $region33: #{tpu_custom_call.1} parent=11 // pred_check
          %p273 = pneg %p199
        $region34: #{tpu_custom_call.1} parent=11 // pred_check_branch
          %275 = sbr.rel (%p273) target = $region36
        $region35: #{tpu_custom_call.1} parent=11 // pred_region
          _
        $region36: #{tpu_custom_call.1} parent=11 // pred_fallthru
          _
      $region12: #{tpu_custom_call.1} parent=5 // pred_fallthru
        _
      %p276 = scmp.lt.s32.totalorder %s21, 2
      // Predicated region
      $region37: #{tpu_custom_call.1} parent=5 // pred_check
        %p277 = pneg %p276
      $region38: #{tpu_custom_call.1} parent=5 // pred_check_branch
        %279 = sbr.rel (%p277) target = $region40
      $region39: #{tpu_custom_call.1} parent=5 // pred_region
        // Predicated region
        $region41: #{tpu_custom_call.1} parent=39 // pred_check
          %p280 = pneg %p41
        $region42: #{tpu_custom_call.1} parent=39 // pred_check_branch
          %282 = sbr.rel (%p280) target = $region44
        $region43: #{tpu_custom_call.1} parent=39 // pred_region
          %p283 = scmp.lt.s32.totalorder %s21, 1
          %s284 = scalar_select %p283, %s21, 1
          %s285 = smul.addr %s284, 8
          %s286 = scalar_lea.vmem %s0, %s285
        $region44: #{tpu_custom_call.1} parent=39 // pred_fallthru
          _
        // Predicated region
        $region45: #{tpu_custom_call.1} parent=39 // pred_check
          %p287 = pneg %p67
        $region46: #{tpu_custom_call.1} parent=39 // pred_check_branch
          %289 = sbr.rel (%p287) target = $region48
        $region47: #{tpu_custom_call.1} parent=39 // pred_region
          %s290 = sand.u32 %s57, 1
          %s291 = scalar_lea.sflag [#allocation3], %s290
          %s292 = sand.u32 %s57, 1
          %s293 = smul.addr %s292, 8
          %s294 = scalar_lea.vmem [#allocation2], %s293
          %s296 = ssub.s32 128, 128
          %297 = vsyncadd %s291, %s296
          %s298 = smul.addr %s21, 128
          %s299 = scalar_lea.hbm %s1, %s298
          %s301 = sshll.u32 %s294, 4
          %s302 = int_to_ptr.vmem [resolvable:$true] %s301
          %304 = dma.hbm_to_vmem [thread:$0]  %s299, 128, %s302, %s291
        $region48: #{tpu_custom_call.1} parent=39 // pred_fallthru
          _
      $region40: #{tpu_custom_call.1} parent=5 // pred_fallthru
        _
      %p305 = scmp.le.s32.totalorder 1, %s21
      %p306 = scmp.lt.s32.totalorder %s21, 3
      %p307 = pnand %p305, %p306
      %p308 = pneg %p307
      // Predicated region
      $region49: #{tpu_custom_call.1} parent=5 // pred_check
        _
      $region50: #{tpu_custom_call.1} parent=5 // pred_check_branch
        %310 = sbr.rel (%p307) target = $region52
      $region51: #{tpu_custom_call.1} parent=5 // pred_region
        %s311 = ssub.s32 %s21, 1
        %s312 = sand.u32 %s60, 1
        %s313 = scalar_lea.sflag [#allocation3], %s312
        %s314 = sand.u32 %s60, 1
        %s315 = smul.addr %s314, 8
        %s316 = scalar_lea.vmem [#allocation2], %s315
        // Predicated region
        $region53: #{tpu_custom_call.1} parent=51 // pred_check
          %p317 = pneg %p73
        $region54: #{tpu_custom_call.1} parent=51 // pred_check_branch
          %319 = sbr.rel (%p317) target = $region56
        $region55: #{tpu_custom_call.1} parent=51 // pred_region
          %320 = dma.done %s313, 128
        $region56: #{tpu_custom_call.1} parent=51 // pred_fallthru
          _
        // Predicated region
        $region57: #{tpu_custom_call.1} parent=51 // pred_check
          %p321 = pneg %p94
        $region58: #{tpu_custom_call.1} parent=51 // pred_check_branch
          %323 = sbr.rel (%p321) target = $region60
        $region59: #{tpu_custom_call.1} parent=51 // pred_region
          %324 = dma.done [#allocation6], 1024
        $region60: #{tpu_custom_call.1} parent=51 // pred_fallthru
          _
        // Predicated region
        $region61: #{tpu_custom_call.1} parent=51 // pred_check
          %p325 = pneg %p157
        $region62: #{tpu_custom_call.1} parent=51 // pred_check_branch
          %327 = sbr.rel (%p325) target = $region64
        $region63: #{tpu_custom_call.1} parent=51 // pred_region
          %328 = dma.done [#allocation6], 16
        $region64: #{tpu_custom_call.1} parent=51 // pred_fallthru
          _
        %p329 = scmp.lt.s32.totalorder %s26, 1
        %s330 = scalar_select %p329, %s26, 1
        %s331 = smul.addr %s330, 8
        %s332 = scalar_lea.vmem %s0, %s331
        %p333 = pneg %p47
        %p334 = pneg %p44
        %s335 = sand.u32 %s60, 1
        %s336 = scalar_lea.sflag [#allocation3], %s335
        %s337 = sand.u32 %s60, 1
        %s338 = smul.addr %s337, 8
        %s339 = scalar_lea.vmem [#allocation2], %s338
        %p340 = pneg %p73
        %p341 = pneg %p70
        %p342 = pneg %p94
        %p343 = pneg %p91
        %p344 = pneg %p115
        %p345 = pneg %p112
        %p346 = pneg %p136
        %p347 = pneg %p133
        %p348 = pneg %p157
        %p349 = pneg %p154
        %p350 = pneg %p178
        %p351 = pneg %p175
        %p352 = pneg %p199
        %p353 = pneg %p196
        %p354 = pneg %p225
        %p355 = pneg %p222
        %s356 = sand.u32 %s212, 1
        %s357 = scalar_lea.sflag [#allocation4], %s356
        %s358 = sand.u32 %s212, 1
        %s359 = scalar_lea.vmem [#allocation8], %s358
        %p360 = scmp.lt.s32.totalorder %s26, 1
        %s361 = scalar_select %p360, %s26, 1
        %s362 = smul.addr %s361, 8
        %s363 = scalar_lea.vmem %s0, %s362
        %v364 = vld [vmem:[%s363] sm:$0xff]
        %v365 = vld [vmem:[%s316] sm:$0xff]
        %vm366 = vcmask 261120
        %v367 = vsel %vm366, %v364, 0.0
        %368 = vadd.xlane.f32.xlu0 %v367
        %v369 = vpop.xlane.xlu0 %368
        %v370 = vrcp.pop 32.0
        %v371 = vmul.f32 %v369, %v370
        %v372 = vsub.f32 %v364, %v371
        %v373 = vmul.f32 %v372, %v372
        %v374 = vsel %vm366, %v373, 0.0
        %375 = vadd.xlane.f32.xlu0 %v374
        %v376 = vpop.xlane.xlu0 %375
        %v377 = vmul.f32 %v376, %v370
        %v378 = vadd.f32 %v377, 1e-05
        %v379 = vrsqrt.pop %v378
        %v380 = vmul.f32 %v372, %v379
        %v381 = vld [vmem:[#allocation5] sm:$0xff]
        %v382 = vld [vmem:[#allocation5 + $0x8] sm:$0xff]
        %v383 = vld [vmem:[#allocation5 + $0x10] sm:$0xff]
        %v384 = vld [vmem:[#allocation5 + $0x18] sm:$0xff]
        %v385 = vld [vmem:[%s3] sm:$0x1]
        %v387 = vlaneseq
        %v388 = vshrl.u32 %v387, 7
        %v389 = vsub.s32 0, %v388
        %v390 = vrot.slane %v385, %v389
        %v393 = vsel %vm366, %v380, 0
        %395 = vmatprep.subr.mxu0 0.0
        %396 = vmatpush1.msra.mxu0 %v381
        %397 = vmatprep.subr.mxu0 0.0
        %398 = vmatpush1.msra.mxu0 %v382
        %399 = vmatprep.subr.mxu0 0.0
        %400 = vmatpush1.msra.mxu0 %v383
        %401 = vmatprep.subr.mxu0 0.0
        %402 = vmatpush1.msra.mxu0 %v384
        %403 = vmatprep.subr.mxu0 0.0
        %404 = vmatpush1.msra.mxu0 0.0
        %405 = vmatprep.subr.mxu0 0.0
        %406 = vmatpush1.msra.mxu0 0.0
        %407 = vmatprep.subr.mxu0 0.0
        %408 = vmatpush1.msra.mxu0 0.0
        %409 = vmatprep.subr.mxu0 0.0
        %410 = vmatpush1.msra.mxu0 0.0
        %411 = vmatprep.subr.mxu0 0.0
        %412 = vmatpush1.msra.mxu0 0.0
        %413 = vmatprep.subr.mxu0 0.0
        %414 = vmatpush1.msra.mxu0 0.0
        %415 = vmatprep.subr.mxu0 0.0
        %416 = vmatpush1.msra.mxu0 0.0
        %417 = vmatprep.subr.mxu0 0.0
        %418 = vmatpush1.msra.mxu0 0.0
        %419 = vmatprep.subr.mxu0 0.0
        %420 = vmatpush1.msra.mxu0 0.0
        %421 = vmatprep.subr.mxu0 0.0
        %422 = vmatpush1.msra.mxu0 0.0
        %423 = vmatprep.subr.mxu0 0.0
        %424 = vmatpush1.msra.mxu0 0.0
        %425 = vmatprep.subr.mxu0 0.0
        %426 = vmatpush1.msra.mxu0 0.0
        %427 = vmatprep.subr.mxu0 0.0
        %428 = vmatpush1.msra.mxu0 0.0
        %429 = vmatprep.subr.mxu0 0.0
        %430 = vmatpush1.msra.mxu0 0.0
        %431 = vmatprep.subr.mxu0 0.0
        %432 = vmatpush1.msra.mxu0 0.0
        %433 = vmatprep.subr.mxu0 0.0
        %434 = vmatpush1.msra.mxu0 0.0
        %435 = vmatprep.subr.mxu0 0.0
        %436 = vmatpush1.msra.mxu0 0.0
        %437 = vmatprep.subr.mxu0 0.0
        %438 = vmatpush1.msra.mxu0 0.0
        %439 = vmatprep.subr.mxu0 0.0
        %440 = vmatpush1.msra.mxu0 0.0
        %441 = vmatprep.subr.mxu0 0.0
        %442 = vmatpush1.msra.mxu0 0.0
        %443 = vmatprep.subr.mxu0 0.0
        %444 = vmatpush1.msra.mxu0 0.0
        %445 = vmatprep.subr.mxu0 0.0
        %446 = vmatpush1.msra.mxu0 0.0
        %447 = vmatprep.subr.mxu0 0.0
        %448 = vmatpush1.msra.mxu0 0.0
        %449 = vmatprep.subr.mxu0 0.0
        %450 = vmatpush1.msra.mxu0 0.0
        %451 = vmatprep.subr.mxu0 0.0
        %452 = vmatpush1.msra.mxu0 0.0
        %453 = vmatprep.subr.mxu0 0.0
        %454 = vmatpush1.msra.mxu0 0.0
        %455 = vmatprep.subr.mxu0 0.0
        %456 = vmatpush1.msra.mxu0 0.0
        %457 = vmatprep.subr.mxu0 0.0
        %458 = vmatpush1.msra.mxu0 0.0
        %459 = vmatprep.mubr.f32.mxu0 0.0
        %460 = vmatmul.mubr.f32.gmra.mrb[0].mxu0 %v393
        %v461 = vpop.f32.mrb[0].mxu0
        %v462 = vadd.f32 %v390, %v461
        %v463 = vpop.f32.mrb[0].mxu0
        %464 = vdwg.mxu0
        %vm465 = vcmask 64512
        %v467 = vsel %vm465, %v365, 0
        %469 = vmatprep.subr.mxu0 0.0
        %470 = vmatpush1.msra.mxu0 %v462
        %471 = vmatprep.subr.mxu0 0.0
        %472 = vmatpush1.msra.mxu0 0.0
        %473 = vmatprep.subr.mxu0 0.0
        %474 = vmatpush1.msra.mxu0 0.0
        %475 = vmatprep.subr.mxu0 0.0
        %476 = vmatpush1.msra.mxu0 0.0
        %477 = vmatprep.subr.mxu0 0.0
        %478 = vmatpush1.msra.mxu0 0.0
        %479 = vmatprep.subr.mxu0 0.0
        %480 = vmatpush1.msra.mxu0 0.0
        %481 = vmatprep.subr.mxu0 0.0
        %482 = vmatpush1.msra.mxu0 0.0
        %483 = vmatprep.subr.mxu0 0.0
        %484 = vmatpush1.msra.mxu0 0.0
        %485 = vmatprep.subr.mxu0 0.0
        %486 = vmatpush1.msra.mxu0 0.0
        %487 = vmatprep.subr.mxu0 0.0
        %488 = vmatpush1.msra.mxu0 0.0
        %489 = vmatprep.subr.mxu0 0.0
        %490 = vmatpush1.msra.mxu0 0.0
        %491 = vmatprep.subr.mxu0 0.0
        %492 = vmatpush1.msra.mxu0 0.0
        %493 = vmatprep.subr.mxu0 0.0
        %494 = vmatpush1.msra.mxu0 0.0
        %495 = vmatprep.subr.mxu0 0.0
        %496 = vmatpush1.msra.mxu0 0.0
        %497 = vmatprep.subr.mxu0 0.0
        %498 = vmatpush1.msra.mxu0 0.0
        %499 = vmatprep.subr.mxu0 0.0
        %500 = vmatpush1.msra.mxu0 0.0
        %501 = vmatprep.subr.mxu0 0.0
        %502 = vmatpush1.msra.mxu0 0.0
        %503 = vmatprep.subr.mxu0 0.0
        %504 = vmatpush1.msra.mxu0 0.0
        %505 = vmatprep.subr.mxu0 0.0
        %506 = vmatpush1.msra.mxu0 0.0
        %507 = vmatprep.subr.mxu0 0.0
        %508 = vmatpush1.msra.mxu0 0.0
        %509 = vmatprep.subr.mxu0 0.0
        %510 = vmatpush1.msra.mxu0 0.0
        %511 = vmatprep.subr.mxu0 0.0
        %512 = vmatpush1.msra.mxu0 0.0
        %513 = vmatprep.subr.mxu0 0.0
        %514 = vmatpush1.msra.mxu0 0.0
        %515 = vmatprep.subr.mxu0 0.0
        %516 = vmatpush1.msra.mxu0 0.0
        %517 = vmatprep.subr.mxu0 0.0
        %518 = vmatpush1.msra.mxu0 0.0
        %519 = vmatprep.subr.mxu0 0.0
        %520 = vmatpush1.msra.mxu0 0.0
        %521 = vmatprep.subr.mxu0 0.0
        %522 = vmatpush1.msra.mxu0 0.0
        %523 = vmatprep.subr.mxu0 0.0
        %524 = vmatpush1.msra.mxu0 0.0
        %525 = vmatprep.subr.mxu0 0.0
        %526 = vmatpush1.msra.mxu0 0.0
        %527 = vmatprep.subr.mxu0 0.0
        %528 = vmatpush1.msra.mxu0 0.0
        %529 = vmatprep.subr.mxu0 0.0
        %530 = vmatpush1.msra.mxu0 0.0
        %531 = vmatprep.subr.mxu0 0.0
        %532 = vmatpush1.msra.mxu0 0.0
        %533 = vmatprep.mubr.f32.mxu0 0.0
        %534 = vmatmul.mubr.f32.gmra.mrb[0].mxu0 %v467
        %v535 = vpop.f32.mrb[0].mxu0
        %v536 = vadd.f32 0.0, %v535
        %v537 = vpop.f32.mrb[0].mxu0
        %538 = vdwg.mxu0
        %vm539 = vcmp.gt.f32.partialorder %v536, 0.0
        %v540 = vmul.f32 %v536, 0.01
        %v541 = vsel %vm539, %v536, %v540
        %v542 = vadd.f32 %v364, %v541
        %v543 = vsel %vm366, %v542, 0.0
        %544 = vadd.xlane.f32.xlu0 %v543
        %v545 = vpop.xlane.xlu0 %544
        %v546 = vmul.f32 %v545, %v370
        %v547 = vsub.f32 %v542, %v546
        %v548 = vmul.f32 %v547, %v547
        %v549 = vsel %vm366, %v548, 0.0
        %550 = vadd.xlane.f32.xlu0 %v549
        %v551 = vpop.xlane.xlu0 %550
        %v552 = vmul.f32 %v551, %v370
        %v553 = vadd.f32 %v552, 1e-05
        %v554 = vrsqrt.pop %v553
        %v555 = vmul.f32 %v547, %v554
        %s556 = scalar_lea.vmem [#allocation5], 32
        %v557 = vld [vmem:[%s556] sm:$0xff]
        %v558 = vld [vmem:[%s556 + $0x8] sm:$0xff]
        %v559 = vld [vmem:[%s556 + $0x10] sm:$0xff]
        %v560 = vld [vmem:[%s556 + $0x18] sm:$0xff]
        %s561 = scalar_lea.vmem %s3, 1
        %v562 = vld [vmem:[%s561] sm:$0x1]
        %v564 = vlaneseq
        %v565 = vshrl.u32 %v564, 7
        %v566 = vsub.s32 0, %v565
        %v567 = vrot.slane %v562, %v566
        %v570 = vsel %vm366, %v555, 0
        %572 = vmatprep.subr.mxu0 0.0
        %573 = vmatpush1.msra.mxu0 %v557
        %574 = vmatprep.subr.mxu0 0.0
        %575 = vmatpush1.msra.mxu0 %v558
        %576 = vmatprep.subr.mxu0 0.0
        %577 = vmatpush1.msra.mxu0 %v559
        %578 = vmatprep.subr.mxu0 0.0
        %579 = vmatpush1.msra.mxu0 %v560
        %580 = vmatprep.subr.mxu0 0.0
        %581 = vmatpush1.msra.mxu0 0.0
        %582 = vmatprep.subr.mxu0 0.0
        %583 = vmatpush1.msra.mxu0 0.0
        %584 = vmatprep.subr.mxu0 0.0
        %585 = vmatpush1.msra.mxu0 0.0
        %586 = vmatprep.subr.mxu0 0.0
        %587 = vmatpush1.msra.mxu0 0.0
        %588 = vmatprep.subr.mxu0 0.0
        %589 = vmatpush1.msra.mxu0 0.0
        %590 = vmatprep.subr.mxu0 0.0
        %591 = vmatpush1.msra.mxu0 0.0
        %592 = vmatprep.subr.mxu0 0.0
        %593 = vmatpush1.msra.mxu0 0.0
        %594 = vmatprep.subr.mxu0 0.0
        %595 = vmatpush1.msra.mxu0 0.0
        %596 = vmatprep.subr.mxu0 0.0
        %597 = vmatpush1.msra.mxu0 0.0
        %598 = vmatprep.subr.mxu0 0.0
        %599 = vmatpush1.msra.mxu0 0.0
        %600 = vmatprep.subr.mxu0 0.0
        %601 = vmatpush1.msra.mxu0 0.0
        %602 = vmatprep.subr.mxu0 0.0
        %603 = vmatpush1.msra.mxu0 0.0
        %604 = vmatprep.subr.mxu0 0.0
        %605 = vmatpush1.msra.mxu0 0.0
        %606 = vmatprep.subr.mxu0 0.0
        %607 = vmatpush1.msra.mxu0 0.0
        %608 = vmatprep.subr.mxu0 0.0
        %609 = vmatpush1.msra.mxu0 0.0
        %610 = vmatprep.subr.mxu0 0.0
        %611 = vmatpush1.msra.mxu0 0.0
        %612 = vmatprep.subr.mxu0 0.0
        %613 = vmatpush1.msra.mxu0 0.0
        %614 = vmatprep.subr.mxu0 0.0
        %615 = vmatpush1.msra.mxu0 0.0
        %616 = vmatprep.subr.mxu0 0.0
        %617 = vmatpush1.msra.mxu0 0.0
        %618 = vmatprep.subr.mxu0 0.0
        %619 = vmatpush1.msra.mxu0 0.0
        %620 = vmatprep.subr.mxu0 0.0
        %621 = vmatpush1.msra.mxu0 0.0
        %622 = vmatprep.subr.mxu0 0.0
        %623 = vmatpush1.msra.mxu0 0.0
        %624 = vmatprep.subr.mxu0 0.0
        %625 = vmatpush1.msra.mxu0 0.0
        %626 = vmatprep.subr.mxu0 0.0
        %627 = vmatpush1.msra.mxu0 0.0
        %628 = vmatprep.subr.mxu0 0.0
        %629 = vmatpush1.msra.mxu0 0.0
        %630 = vmatprep.subr.mxu0 0.0
        %631 = vmatpush1.msra.mxu0 0.0
        %632 = vmatprep.subr.mxu0 0.0
        %633 = vmatpush1.msra.mxu0 0.0
        %634 = vmatprep.subr.mxu0 0.0
        %635 = vmatpush1.msra.mxu0 0.0
        %636 = vmatprep.mubr.f32.mxu0 0.0
        %637 = vmatmul.mubr.f32.gmra.mrb[0].mxu0 %v570
        %v638 = vpop.f32.mrb[0].mxu0
        %v639 = vadd.f32 %v567, %v638
        %v640 = vpop.f32.mrb[0].mxu0
        %641 = vdwg.mxu0
        %642 = vmatprep.subr.mxu0 0.0
        %643 = vmatpush1.msra.mxu0 %v639
        %644 = vmatprep.subr.mxu0 0.0
        %645 = vmatpush1.msra.mxu0 0.0
        %646 = vmatprep.subr.mxu0 0.0
        %647 = vmatpush1.msra.mxu0 0.0
        %648 = vmatprep.subr.mxu0 0.0
        %649 = vmatpush1.msra.mxu0 0.0
        %650 = vmatprep.subr.mxu0 0.0
        %651 = vmatpush1.msra.mxu0 0.0
        %652 = vmatprep.subr.mxu0 0.0
        %653 = vmatpush1.msra.mxu0 0.0
        %654 = vmatprep.subr.mxu0 0.0
        %655 = vmatpush1.msra.mxu0 0.0
        %656 = vmatprep.subr.mxu0 0.0
        %657 = vmatpush1.msra.mxu0 0.0
        %658 = vmatprep.subr.mxu0 0.0
        %659 = vmatpush1.msra.mxu0 0.0
        %660 = vmatprep.subr.mxu0 0.0
        %661 = vmatpush1.msra.mxu0 0.0
        %662 = vmatprep.subr.mxu0 0.0
        %663 = vmatpush1.msra.mxu0 0.0
        %664 = vmatprep.subr.mxu0 0.0
        %665 = vmatpush1.msra.mxu0 0.0
        %666 = vmatprep.subr.mxu0 0.0
        %667 = vmatpush1.msra.mxu0 0.0
        %668 = vmatprep.subr.mxu0 0.0
        %669 = vmatpush1.msra.mxu0 0.0
        %670 = vmatprep.subr.mxu0 0.0
        %671 = vmatpush1.msra.mxu0 0.0
        %672 = vmatprep.subr.mxu0 0.0
        %673 = vmatpush1.msra.mxu0 0.0
        %674 = vmatprep.subr.mxu0 0.0
        %675 = vmatpush1.msra.mxu0 0.0
        %676 = vmatprep.subr.mxu0 0.0
        %677 = vmatpush1.msra.mxu0 0.0
        %678 = vmatprep.subr.mxu0 0.0
        %679 = vmatpush1.msra.mxu0 0.0
        %680 = vmatprep.subr.mxu0 0.0
        %681 = vmatpush1.msra.mxu0 0.0
        %682 = vmatprep.subr.mxu0 0.0
        %683 = vmatpush1.msra.mxu0 0.0
        %684 = vmatprep.subr.mxu0 0.0
        %685 = vmatpush1.msra.mxu0 0.0
        %686 = vmatprep.subr.mxu0 0.0
        %687 = vmatpush1.msra.mxu0 0.0
        %688 = vmatprep.subr.mxu0 0.0
        %689 = vmatpush1.msra.mxu0 0.0
        %690 = vmatprep.subr.mxu0 0.0
        %691 = vmatpush1.msra.mxu0 0.0
        %692 = vmatprep.subr.mxu0 0.0
        %693 = vmatpush1.msra.mxu0 0.0
        %694 = vmatprep.subr.mxu0 0.0
        %695 = vmatpush1.msra.mxu0 0.0
        %696 = vmatprep.subr.mxu0 0.0
        %697 = vmatpush1.msra.mxu0 0.0
        %698 = vmatprep.subr.mxu0 0.0
        %699 = vmatpush1.msra.mxu0 0.0
        %700 = vmatprep.subr.mxu0 0.0
        %701 = vmatpush1.msra.mxu0 0.0
        %702 = vmatprep.subr.mxu0 0.0
        %703 = vmatpush1.msra.mxu0 0.0
        %704 = vmatprep.subr.mxu0 0.0
        %705 = vmatpush1.msra.mxu0 0.0
        %706 = vmatprep.mubr.f32.mxu0 0.0
        %707 = vmatmul.mubr.f32.gmra.mrb[0].mxu0 %v467
        %v708 = vpop.f32.mrb[0].mxu0
        %v709 = vadd.f32 0.0, %v708
        %v710 = vpop.f32.mrb[0].mxu0
        %711 = vdwg.mxu0
        %vm712 = vcmp.gt.f32.partialorder %v709, 0.0
        %v713 = vmul.f32 %v709, 0.01
        %v714 = vsel %vm712, %v709, %v713
        %v715 = vadd.f32 %v542, %v714
        %v716 = vsel %vm366, %v715, 0.0
        %v717 = vrot.slane %v716, 4
        %v718 = vadd.f32 %v716, %v717
        %v719 = vrot.slane %v718, 2
        %v720 = vadd.f32 %v718, %v719
        %v721 = vrot.slane %v720, 1
        %v722 = vadd.f32 %v720, %v721
        %v723 = vld [vmem:[%s4] sm:$0xff]
        %v724 = vld [vmem:[%s4 + $0x8] sm:$0xff]
        %v725 = vld [vmem:[%s4 + $0x10] sm:$0xff]
        %v726 = vld [vmem:[%s4 + $0x18] sm:$0xff]
        %v727 = vld [vmem:[#allocation7] sm:$0x1]
        %v729 = vsel %vm366, %v722, 0
        %731 = vmatprep.subr.mxu0 0.0
        %732 = vmatpush1.msra.mxu0 %v723
        %733 = vmatprep.subr.mxu0 0.0
        %734 = vmatpush1.msra.mxu0 %v724
        %735 = vmatprep.subr.mxu0 0.0
        %736 = vmatpush1.msra.mxu0 %v725
        %737 = vmatprep.subr.mxu0 0.0
        %738 = vmatpush1.msra.mxu0 %v726
        %739 = vmatprep.subr.mxu0 0.0
        %740 = vmatpush1.msra.mxu0 0.0
        %741 = vmatprep.subr.mxu0 0.0
        %742 = vmatpush1.msra.mxu0 0.0
        %743 = vmatprep.subr.mxu0 0.0
        %744 = vmatpush1.msra.mxu0 0.0
        %745 = vmatprep.subr.mxu0 0.0
        %746 = vmatpush1.msra.mxu0 0.0
        %747 = vmatprep.subr.mxu0 0.0
        %748 = vmatpush1.msra.mxu0 0.0
        %749 = vmatprep.subr.mxu0 0.0
        %750 = vmatpush1.msra.mxu0 0.0
        %751 = vmatprep.subr.mxu0 0.0
        %752 = vmatpush1.msra.mxu0 0.0
        %753 = vmatprep.subr.mxu0 0.0
        %754 = vmatpush1.msra.mxu0 0.0
        %755 = vmatprep.subr.mxu0 0.0
        %756 = vmatpush1.msra.mxu0 0.0
        %757 = vmatprep.subr.mxu0 0.0
        %758 = vmatpush1.msra.mxu0 0.0
        %759 = vmatprep.subr.mxu0 0.0
        %760 = vmatpush1.msra.mxu0 0.0
        %761 = vmatprep.subr.mxu0 0.0
        %762 = vmatpush1.msra.mxu0 0.0
        %763 = vmatprep.subr.mxu0 0.0
        %764 = vmatpush1.msra.mxu0 0.0
        %765 = vmatprep.subr.mxu0 0.0
        %766 = vmatpush1.msra.mxu0 0.0
        %767 = vmatprep.subr.mxu0 0.0
        %768 = vmatpush1.msra.mxu0 0.0
        %769 = vmatprep.subr.mxu0 0.0
        %770 = vmatpush1.msra.mxu0 0.0
        %771 = vmatprep.subr.mxu0 0.0
        %772 = vmatpush1.msra.mxu0 0.0
        %773 = vmatprep.subr.mxu0 0.0
        %774 = vmatpush1.msra.mxu0 0.0
        %775 = vmatprep.subr.mxu0 0.0
        %776 = vmatpush1.msra.mxu0 0.0
        %777 = vmatprep.subr.mxu0 0.0
        %778 = vmatpush1.msra.mxu0 0.0
        %779 = vmatprep.subr.mxu0 0.0
        %780 = vmatpush1.msra.mxu0 0.0
        %781 = vmatprep.subr.mxu0 0.0
        %782 = vmatpush1.msra.mxu0 0.0
        %783 = vmatprep.subr.mxu0 0.0
        %784 = vmatpush1.msra.mxu0 0.0
        %785 = vmatprep.subr.mxu0 0.0
        %786 = vmatpush1.msra.mxu0 0.0
        %787 = vmatprep.subr.mxu0 0.0
        %788 = vmatpush1.msra.mxu0 0.0
        %789 = vmatprep.subr.mxu0 0.0
        %790 = vmatpush1.msra.mxu0 0.0
        %791 = vmatprep.subr.mxu0 0.0
        %792 = vmatpush1.msra.mxu0 0.0
        %793 = vmatprep.subr.mxu0 0.0
        %794 = vmatpush1.msra.mxu0 0.0
        %795 = vmatprep.mubr.f32.mxu0 0.0
        %796 = vmatmul.mubr.f32.gmra.mrb[0].mxu0 %v729
        %v797 = vpop.f32.mrb[0].mxu0
        %v798 = vadd.f32 %v727, %v797
        %v799 = vpop.f32.mrb[0].mxu0
        %800 = vdwg.mxu0
        %vm801 = vcmp.gt.f32.partialorder %v798, 0.0
        %v802 = vmul.f32 %v798, 0.01
        %v803 = vsel %vm801, %v798, %v802
        %v804 = vld [vmem:[%s6] sm:$0xff]
        %v805 = vld [vmem:[%s6 + $0x8] sm:$0xff]
        %v806 = vld [vmem:[%s6 + $0x10] sm:$0xff]
        %v807 = vld [vmem:[%s6 + $0x18] sm:$0xff]
        %v808 = vld [vmem:[%s7] sm:$0x1]
        %v810 = vsel %vm366, %v803, 0
        %812 = vmatprep.subr.mxu0 0.0
        %813 = vmatpush1.msra.mxu0 %v804
        %814 = vmatprep.subr.mxu0 0.0
        %815 = vmatpush1.msra.mxu0 %v805
        %816 = vmatprep.subr.mxu0 0.0
        %817 = vmatpush1.msra.mxu0 %v806
        %818 = vmatprep.subr.mxu0 0.0
        %819 = vmatpush1.msra.mxu0 %v807
        %820 = vmatprep.subr.mxu0 0.0
        %821 = vmatpush1.msra.mxu0 0.0
        %822 = vmatprep.subr.mxu0 0.0
        %823 = vmatpush1.msra.mxu0 0.0
        %824 = vmatprep.subr.mxu0 0.0
        %825 = vmatpush1.msra.mxu0 0.0
        %826 = vmatprep.subr.mxu0 0.0
        %827 = vmatpush1.msra.mxu0 0.0
        %828 = vmatprep.subr.mxu0 0.0
        %829 = vmatpush1.msra.mxu0 0.0
        %830 = vmatprep.subr.mxu0 0.0
        %831 = vmatpush1.msra.mxu0 0.0
        %832 = vmatprep.subr.mxu0 0.0
        %833 = vmatpush1.msra.mxu0 0.0
        %834 = vmatprep.subr.mxu0 0.0
        %835 = vmatpush1.msra.mxu0 0.0
        %836 = vmatprep.subr.mxu0 0.0
        %837 = vmatpush1.msra.mxu0 0.0
        %838 = vmatprep.subr.mxu0 0.0
        %839 = vmatpush1.msra.mxu0 0.0
        %840 = vmatprep.subr.mxu0 0.0
        %841 = vmatpush1.msra.mxu0 0.0
        %842 = vmatprep.subr.mxu0 0.0
        %843 = vmatpush1.msra.mxu0 0.0
        %844 = vmatprep.subr.mxu0 0.0
        %845 = vmatpush1.msra.mxu0 0.0
        %846 = vmatprep.subr.mxu0 0.0
        %847 = vmatpush1.msra.mxu0 0.0
        %848 = vmatprep.subr.mxu0 0.0
        %849 = vmatpush1.msra.mxu0 0.0
        %850 = vmatprep.subr.mxu0 0.0
        %851 = vmatpush1.msra.mxu0 0.0
        %852 = vmatprep.subr.mxu0 0.0
        %853 = vmatpush1.msra.mxu0 0.0
        %854 = vmatprep.subr.mxu0 0.0
        %855 = vmatpush1.msra.mxu0 0.0
        %856 = vmatprep.subr.mxu0 0.0
        %857 = vmatpush1.msra.mxu0 0.0
        %858 = vmatprep.subr.mxu0 0.0
        %859 = vmatpush1.msra.mxu0 0.0
        %860 = vmatprep.subr.mxu0 0.0
        %861 = vmatpush1.msra.mxu0 0.0
        %862 = vmatprep.subr.mxu0 0.0
        %863 = vmatpush1.msra.mxu0 0.0
        %864 = vmatprep.subr.mxu0 0.0
        %865 = vmatpush1.msra.mxu0 0.0
        %866 = vmatprep.subr.mxu0 0.0
        %867 = vmatpush1.msra.mxu0 0.0
        %868 = vmatprep.subr.mxu0 0.0
        %869 = vmatpush1.msra.mxu0 0.0
        %870 = vmatprep.subr.mxu0 0.0
        %871 = vmatpush1.msra.mxu0 0.0
        %872 = vmatprep.subr.mxu0 0.0
        %873 = vmatpush1.msra.mxu0 0.0
        %874 = vmatprep.subr.mxu0 0.0
        %875 = vmatpush1.msra.mxu0 0.0
        %876 = vmatprep.mubr.f32.mxu0 0.0
        %877 = vmatmul.mubr.f32.gmra.mrb[0].mxu0 %v810
        %v878 = vpop.f32.mrb[0].mxu0
        %v879 = vadd.f32 %v808, %v878
        %v880 = vpop.f32.mrb[0].mxu0
        %881 = vdwg.mxu0
        %vm882 = vcmp.gt.f32.partialorder %v879, 0.0
        %v883 = vmul.f32 %v879, 0.01
        %v884 = vsel %vm882, %v879, %v883
        %vm885 = vcmask 57344
        %v886 = vsel %vm885, %v884, -inf
        %887 = vmax.xlane.f32.xlu0 %v886
        %v888 = vpop.xlane.xlu0 %887
        %v889 = vsub.f32 %v884, %v888
        %v890 = vmul.f32 %v889, 1.442695
        %v891 = vpow.pop %v890
        %v892 = vsel %vm885, %v891, 0.0
        %893 = vadd.xlane.f32.xlu0 %v892
        %v894 = vpop.xlane.xlu0 %893
        %v895 = vlog2.pop %v894
        %v896 = vmul.f32 %v895, 0.6931472
        %v897 = vadd.f32 %v888, %v896
        %v898 = vsub.f32 %v884, %v897
        %899 = vst.msk [vmem:[%s359] sm:$0x1] %vm885, %v898
        %s900 = sand.u32 %s212, 1
        %s901 = scalar_lea.sflag [#allocation4], %s900
        %s902 = sand.u32 %s212, 1
        %s903 = scalar_lea.vmem [#allocation8], %s902
        // Predicated region
        $region65: #{tpu_custom_call.1} parent=51 // pred_check
          %p904 = pneg %p222
        $region66: #{tpu_custom_call.1} parent=51 // pred_check_branch
          %906 = sbr.rel (%p904) target = $region68
        $region67: #{tpu_custom_call.1} parent=51 // pred_region
          %s908 = ssub.s32 16, 16
          %909 = vsyncadd %s901, %s908
          %s910 = smul.addr %s26, 16
          %s911 = scalar_lea.hbm %s8, %s910
          %s913 = sshll.u32 %s903, 4
          %s914 = int_to_ptr.vmem [resolvable:$true] %s913
          %916 = dma.vmem_to_hbm [thread:$0]  %s914, 16, %s911, %s901
        $region68: #{tpu_custom_call.1} parent=51 // pred_fallthru
          _
      $region52: #{tpu_custom_call.1} parent=5 // pred_fallthru
        _
      %p917 = scmp.le.s32.totalorder 2, %s21
      // Predicated region
      $region69: #{tpu_custom_call.1} parent=5 // pred_check
        %p918 = pneg %p917
      $region70: #{tpu_custom_call.1} parent=5 // pred_check_branch
        %920 = sbr.rel (%p918) target = $region72
      $region71: #{tpu_custom_call.1} parent=5 // pred_region
        %s921 = ssub.s32 %s21, 2
        // Predicated region
        $region73: #{tpu_custom_call.1} parent=71 // pred_check
          %p922 = pneg %p228
        $region74: #{tpu_custom_call.1} parent=71 // pred_check_branch
          %924 = sbr.rel (%p922) target = $region76
        $region75: #{tpu_custom_call.1} parent=71 // pred_region
          %s925 = sand.u32 %s213, 1
          %s926 = scalar_lea.sflag [#allocation4], %s925
          %s927 = sand.u32 %s213, 1
          %s928 = scalar_lea.vmem [#allocation8], %s927
          %929 = dma.done %s926, 16
        $region76: #{tpu_custom_call.1} parent=71 // pred_fallthru
          _
      $region72: #{tpu_custom_call.1} parent=5 // pred_fallthru
        _
    $region6: #{tpu_custom_call.1} parent=1 // loop_footer
      %s25 = sadd.s32 1, %s21
    $region7: #{tpu_custom_call.1} parent=1 // loop_footer_branch
      %20 = sbr.rel target = $region3
    $region8: #{tpu_custom_call.1} parent=1 // loop_exit
      _
    %930 = vsyncpa [#allocation3], 1
    %s931 = scalar_lea.sflag [#allocation3], 1
    %932 = vsyncpa %s931, 1
    %933 = vsyncpa [#allocation6], 1
    %934 = vsyncpa [#allocation4], 1
    %s935 = scalar_lea.sflag [#allocation4], 1
    %936 = vsyncpa %s935, 1

</llo_original>
